<compile_context>
chip_gen: v6e
topology: v6e:2x2x1
jax: 0.10.0
libtpu: 0.0.40
codegen_flags: <defaults>
</compile_context>

<pallas_src>
import jax
import jax.numpy as jnp
from jax import lax
from jax.experimental import pallas as pl
from jax.experimental.pallas import tpu as pltpu


# ----------------------------------------------------------------------------
# Fused kernel: down-conv + LeakyReLU + transposed up-conv + ReLU + skip merge
# ----------------------------------------------------------------------------
def _fused_unet_kernel(xs_ref, xsk_ref, wd0_ref, wd1_ref, bd_ref,
                       wu_ref, bu_ref, o_ref):
    # xs_ref : (Nb, Hh+1, (Wh+1)*4*Cin) f32   space-to-depth padded input
    # xsk_ref: (Nb, 2, Hh, 128)         f32   skip, parity-split, lane-padded
    # wd0_ref: ((Wh+1)*4*Cin, Wh*Cmid)  bf16  down weight, kh-block 0 (top rows)
    # wd1_ref: ((Wh+1)*4*Cin, Wh*Cmid)  bf16  down weight, kh-block 1 (bottom rows)
    # bd_ref : (1, Wh*Cmid)             f32
    # wu_ref : (2, 2, Wh*Cmid, 128)     bf16  up weights [parity, window], skip cols 0
    # bu_ref : (1, 128)                 f32   up bias, skip lanes 0
    # o_ref  : (Nb, 2, Hh, 128)         f32   [skip | up] per output-row parity
    nb, hp1, kd = xs_ref.shape
    hh = hp1 - 1
    m = nb * hh
    lanes = o_ref.shape[-1]

    # ---- down: Conv2d(Cin, Cmid, 4, s=2, p=1) + LeakyReLU(0.2); split-K dots.
    top = xs_ref[:, 0:hh, :].reshape(m, kd).astype(jnp.bfloat16)
    bot = xs_ref[:, 1:hh + 1, :].reshape(m, kd).astype(jnp.bfloat16)
    h = jnp.dot(top, wd0_ref[...], preferred_element_type=jnp.float32)
    h = h + jnp.dot(bot, wd1_ref[...], preferred_element_type=jnp.float32)
    h = h + bd_ref[...]
    h = jnp.where(h >= 0, h, 0.2 * h)                       # (m, Wh*Cmid) f32

    # ---- +/-1-row shifted windows of h; per-sample boundary rows zeroed
    #      (replaces the old zero-padded VMEM scratch round trip).
    row = lax.broadcasted_iota(jnp.int32, (nb, hh, h.shape[-1]), 1).reshape(h.shape)
    h_dn = jnp.where(row == 0, 0.0, pltpu.roll(h, shift=1, axis=0))
    h_up = jnp.where(row == hh - 1, 0.0, pltpu.roll(h, shift=m - 1, axis=0))
    hc, hd, hu = (v.astype(jnp.bfloat16) for v in (h, h_dn, h_up))

    # ---- up: ConvTranspose2d(Cmid, Cin, 4, s=2, p=1) + ReLU, polyphase by
    #      output-row parity; 128-lane output, skip lanes added in
    #      (relu(0 + 0) == 0 keeps them exact). Single unmasked 128-lane store.
    windows = ((hd, hc), (hc, hu))                          # parity 0 / parity 1
    for a in range(2):                                      # static unroll
        w0, w1 = windows[a]
        u = jnp.dot(w0, wu_ref[a, 0], preferred_element_type=jnp.float32)
        u = u + jnp.dot(w1, wu_ref[a, 1], preferred_element_type=jnp.float32)
        u = jnp.maximum(u + bu_ref[...], 0.0)               # (m, 128) f32
        o_ref[:, a, :, :] = (xsk_ref[:, a, :, :] +
                             u.reshape(nb, hh, lanes)).astype(o_ref.dtype)


# ----------------------------------------------------------------------------
# One-time weight layout preparation (im2col / polyphase matrices, bf16)
# ----------------------------------------------------------------------------
def prepare_params(params, height, width):
    w_down, b_down = params["w_down"], params["b_down"]    # (4,4,Cin,Cmid), (Cmid,)
    w_up, b_up = params["w_up"], params["b_up"]            # (4,4,Cmid,Cin), (Cin,)
    assert w_down.shape[:2] == (4, 4) and w_up.shape[:2] == (4, 4)
    cin, cmid = w_down.shape[2], w_down.shape[3]
    wh = width // 2
    lanes_skip = width * cin                               # skip lanes (x, c)
    lanes_up = wh * 2 * cin                                # up lanes (xo, b, c)

    # --- down: space-to-depth + column-banded im2col, split by kh block.
    # w2[a, b, (r*2+s)*cin + c, co] = w_down[2a+r, 2b+s, c, co]
    w2 = w_down.reshape(2, 2, 2, 2, cin, cmid).transpose(0, 2, 1, 3, 4, 5)
    w2 = w2.reshape(2, 2, 4 * cin, cmid)
    n_idx = jnp.arange(wh + 1)
    j_idx = jnp.arange(wh)
    kw_idx = jnp.arange(2)
    sel_d = (n_idx[None, :, None] ==
             j_idx[None, None, :] + kw_idx[:, None, None]).astype(jnp.float32)
    wd = jnp.einsum('abcd,bnj->ancjd', w2, sel_d)
    wd = wd.reshape(2, (wh + 1) * 4 * cin, wh * cmid)
    wd0, wd1 = wd[0].astype(jnp.bfloat16), wd[1].astype(jnp.bfloat16)
    bd = jnp.tile(b_down, wh).reshape(1, wh * cmid).astype(jnp.float32)

    # --- up: polyphase per (output-row parity a, row window d); horizontal zero
    # padding folded into structural zeros; output padded to skip+up lanes
    # (first `lanes_skip` columns zero -> exact skip passthrough via add).
    wf = w_up[::-1, ::-1]                                   # spatial flip
    wphase = wf.reshape(2, 2, 2, 2, cmid, cin)              # (d, a, e, b, i, o)
    e_idx = jnp.arange(2)
    jj = jnp.arange(wh)
    xx = jnp.arange(wh)
    bb = jnp.arange(2)
    sel_u = (jj[None, :, None, None] + 1 ==
             xx[None, None, :, None] + bb[None, None, None, :] +
             e_idx[:, None, None, None]).astype(jnp.float32)  # (e, j, x, b)
    wu = jnp.einsum('daebio,ejxb->adjixbo', wphase, sel_u)
    wu = wu.reshape(2, 2, wh * cmid, lanes_up)              # (parity, window, K, up lanes)
    wu = jnp.pad(wu, ((0, 0), (0, 0), (0, 0), (lanes_skip, 0))).astype(jnp.bfloat16)
    bu = jnp.tile(b_up, 2 * wh).reshape(1, lanes_up).astype(jnp.float32)
    bu = jnp.pad(bu, ((0, 0), (lanes_skip, 0)))

    return {"Wd0": wd0, "Wd1": wd1, "bd": bd, "Wu": wu, "bu": bu, "cmid": cmid}


# ----------------------------------------------------------------------------
# MinimalUnetV2.forward  (is_sub=False, is_attention=False, withoutskip=False)
# ----------------------------------------------------------------------------
def minimal_unet_v2_forward(x_nchw, prepped, mask=None):
    n, cin, hgt, wid = x_nchw.shape
    hh, wh = hgt // 2, wid // 2
    cmid = prepped["cmid"]
    kd = (wh + 1) * 4 * cin
    lanes_skip = wid * cin
    lanes = prepped["Wu"].shape[-1]                         # skip + up lanes (128)

    # ---- layout glue (KB-scale; XLA fuses most of it):
    #      NHWC + 1-pad + space-to-depth, and the parity-split lane-padded skip.
    x_nhwc = jnp.transpose(x_nchw, (0, 2, 3, 1))
    xp = jnp.pad(x_nhwc, ((0, 0), (1, 1), (1, 1), (0, 0)))
    planes = [xp[:, r::2, s::2, :] for r in range(2) for s in range(2)]
    xs2 = jnp.concatenate(planes, axis=-1).reshape(n, hh + 1, kd)
    xskip = x_nhwc.reshape(n, hh, 2, lanes_skip).transpose(0, 2, 1, 3)
    xskip = jnp.pad(xskip, ((0, 0), (0, 0), (0, 0), (0, lanes - lanes_skip)))

    # ---- batch folding: at most 2 "parallel" grid steps (v7x: one per TC);
    #      each step handles Nb samples -> matmul M = Nb*Hh instead of Hh.
    num_steps = 1 if n == 1 else 2
    nb = pl.cdiv(n, num_steps)
    n_pad = num_steps * nb
    if n_pad != n:
        xs2 = jnp.pad(xs2, ((0, n_pad - n), (0, 0), (0, 0)))
        xskip = jnp.pad(xskip, ((0, n_pad - n), (0, 0), (0, 0), (0, 0)))

    m_total = n_pad * hh
    flops = (2 * 2 * m_total * kd * (wh * cmid) +           # down: 2 dots
             4 * 2 * m_total * (wh * cmid) * lanes)         # up:   4 dots
    bytes_accessed = int(
        xs2.size * 4 + xskip.size * 4 + n_pad * 2 * hh * lanes * 4 +
        (prepped["Wd0"].size + prepped["Wd1"].size + prepped["Wu"].size) * 2 +
        (prepped["bd"].size + prepped["bu"].size) * 4)

    out = pl.pallas_call(
        _fused_unet_kernel,
        out_shape=jax.ShapeDtypeStruct((n_pad, 2, hh, lanes), jnp.float32),
        grid=(num_steps,),
        in_specs=[
            pl.BlockSpec((nb, hh + 1, kd), lambda i: (i, 0, 0)),
            pl.BlockSpec((nb, 2, hh, lanes), lambda i: (i, 0, 0, 0)),
            pl.BlockSpec(prepped["Wd0"].shape, lambda i: (0, 0)),
            pl.BlockSpec(prepped["Wd1"].shape, lambda i: (0, 0)),
            pl.BlockSpec(prepped["bd"].shape, lambda i: (0, 0)),
            pl.BlockSpec(prepped["Wu"].shape, lambda i: (0, 0, 0, 0)),
            pl.BlockSpec(prepped["bu"].shape, lambda i: (0, 0)),
        ],
        out_specs=pl.BlockSpec((nb, 2, hh, lanes), lambda i: (i, 0, 0, 0)),
        compiler_params=pltpu.CompilerParams(dimension_semantics=("parallel",)),
        cost_estimate=pl.CostEstimate(flops=flops, transcendentals=0,
                                      bytes_accessed=bytes_accessed),
    )(xs2, xskip, prepped["Wd0"], prepped["Wd1"], prepped["bd"],
      prepped["Wu"], prepped["bu"])

    # (n, a, yo, src, x, c) -> NCHW (n, src*Cin + c, 2*yo + a, x)
    out = out[:n].reshape(n, 2, hh, 2, wid, cin)
    out = out.transpose(0, 3, 5, 2, 1, 4).reshape(n, 2 * cin, hgt, wid)
    return out, mask


# ----------------------------------------------------------------------------
# Pure-JAX reference (lax convs) for correctness checking
# ----------------------------------------------------------------------------
def reference_forward(x_nchw, params):
    dn = ("NHWC", "HWIO", "NHWC")
    x = jnp.transpose(x_nchw, (0, 2, 3, 1))
    h = lax.conv_general_dilated(x, params["w_down"], (2, 2), ((1, 1), (1, 1)),
                                 dimension_numbers=dn) + params["b_down"]
    h = jnp.where(h >= 0, h, 0.2 * h)
    u = lax.conv_general_dilated(h, params["w_up"][::-1, ::-1], (1, 1),
                                 ((2, 2), (2, 2)), lhs_dilation=(2, 2),
                                 dimension_numbers=dn) + params["b_up"]
    u = jnp.maximum(u, 0.0)
    cat = jnp.concatenate([x, u], axis=-1)
    return jnp.transpose(cat, (0, 3, 1, 2))


if __name__ == "__main__":
    N, Cin, H, W = 4, 4, 16, 16
    Cmid = 8
    key = jax.random.PRNGKey(0)
    k1, k2, k3, k4, k5 = jax.random.split(key, 5)

    x = jax.random.normal(k1, (N, Cin, H, W), jnp.float32)
    params = {
        # Conv2d weight stored HWIO (== torch (Cout,Cin,KH,KW).transpose(2,3,1,0))
        "w_down": 0.1 * jax.random.normal(k2, (4, 4, Cin, Cmid), jnp.float32),
        "b_down": 0.1 * jax.random.normal(k3, (Cmid,), jnp.float32),
        # ConvTranspose2d weight stored (KH,KW,Cmid,Cin) (== torch (Cin_t,Cout,KH,KW).transpose(2,3,0,1))
        "w_up": 0.1 * jax.random.normal(k4, (4, 4, Cmid, Cin), jnp.float32),
        "b_up": 0.1 * jax.random.normal(k5, (Cin,), jnp.float32),
    }

    prepped = prepare_params(params, H, W)          # one-time weight layout prep
    fwd = jax.jit(lambda xx: minimal_unet_v2_forward(xx, prepped))
    out, mask = fwd(x)
    out = jax.block_until_ready(out)

    assert out.shape == (N, 2 * Cin, H, W), out.shape
    ref = reference_forward(x, params)
    # bf16 MXU operands -> relaxed tolerance (skip half stays exact f32 passthrough).
    if not jnp.allclose(out, ref, atol=4e-2, rtol=4e-2):
        err = float(jnp.max(jnp.abs(out - ref)))
        raise AssertionError(f"Pallas output does not match reference (max err {err:.3e})")
    print("KERNEL_OK")
</pallas_src>

<mosaic_0001>
module attributes {stable_mosaic.version = 11 : i64} {
  func.func @_fused_unet_kernel(%arg0: i32, %arg1: memref<2x9x144xf32, #tpu.memory_space<vmem>>, %arg2: memref<2x2x8x128xf32, #tpu.memory_space<vmem>>, %arg3: memref<144x64xbf16, #tpu.memory_space<vmem>>, %arg4: memref<144x64xbf16, #tpu.memory_space<vmem>>, %arg5: memref<1x64xf32, #tpu.memory_space<vmem>>, %arg6: memref<2x2x64x128xbf16, #tpu.memory_space<vmem>>, %arg7: memref<1x128xf32, #tpu.memory_space<vmem>>, %arg8: memref<2x2x8x128xf32, #tpu.memory_space<vmem>>) attributes {dimension_semantics = [#tpu.dimension_semantics<parallel>], iteration_bounds = array<i64: 2>, scalar_prefetch = 0 : i64, scratch_operands = 0 : i64, tpu.core_type = #tpu.core_type<tc>, window_params = [{transform_indices = @transform_0, window_bounds = array<i64: 2, 9, 144>}, {transform_indices = @transform_1, window_bounds = array<i64: 2, 2, 8, 128>}, {pipeline_mode = #tpu.pipeline_mode<synchronous>, transform_indices = @transform_2, window_bounds = array<i64: 144, 64>}, {pipeline_mode = #tpu.pipeline_mode<synchronous>, transform_indices = @transform_3, window_bounds = array<i64: 144, 64>}, {pipeline_mode = #tpu.pipeline_mode<synchronous>, transform_indices = @transform_4, window_bounds = array<i64: 1, 64>}, {pipeline_mode = #tpu.pipeline_mode<synchronous>, transform_indices = @transform_5, window_bounds = array<i64: 2, 2, 64, 128>}, {pipeline_mode = #tpu.pipeline_mode<synchronous>, transform_indices = @transform_6, window_bounds = array<i64: 1, 128>}, {transform_indices = @transform_7, window_bounds = array<i64: 2, 2, 8, 128>}]} {
    %c0 = arith.constant 0 : index
    %c0_0 = arith.constant 0 : index
    %c0_1 = arith.constant 0 : index
    %0 = vector.load %arg1[%c0, %c0_0, %c0_1] : memref<2x9x144xf32, #tpu.memory_space<vmem>>, vector<2x8x144xf32>
    %1 = vector.shape_cast %0 : vector<2x8x144xf32> to vector<16x144xf32>
    %2 = arith.truncf %1 : vector<16x144xf32> to vector<16x144xbf16>
    %c0_2 = arith.constant 0 : index
    %c1 = arith.constant 1 : index
    %c0_3 = arith.constant 0 : index
    %3 = vector.load %arg1[%c0_2, %c1, %c0_3] : memref<2x9x144xf32, #tpu.memory_space<vmem>>, vector<2x8x144xf32>
    %4 = vector.shape_cast %3 : vector<2x8x144xf32> to vector<16x144xf32>
    %5 = arith.truncf %4 : vector<16x144xf32> to vector<16x144xbf16>
    %c0_4 = arith.constant 0 : index
    %c0_5 = arith.constant 0 : index
    %6 = vector.load %arg3[%c0_4, %c0_5] : memref<144x64xbf16, #tpu.memory_space<vmem>>, vector<144x64xbf16>
    %cst = arith.constant dense<0.000000e+00> : vector<16x64xf32>
    %7 = tpu.matmul %2, %6, %cst {dimension_numbers = #tpu.dot_dimension_numbers<[1], [0], [0], [1], [0, 0, 1, 1], [], []>} : vector<16x144xbf16>, vector<144x64xbf16>, vector<16x64xf32> -> vector<16x64xf32>
    %c0_6 = arith.constant 0 : index
    %c0_7 = arith.constant 0 : index
    %8 = vector.load %arg4[%c0_6, %c0_7] : memref<144x64xbf16, #tpu.memory_space<vmem>>, vector<144x64xbf16>
    %cst_8 = arith.constant dense<0.000000e+00> : vector<16x64xf32>
    %9 = tpu.matmul %5, %8, %cst_8 {dimension_numbers = #tpu.dot_dimension_numbers<[1], [0], [0], [1], [0, 0, 1, 1], [], []>} : vector<16x144xbf16>, vector<144x64xbf16>, vector<16x64xf32> -> vector<16x64xf32>
    %10 = arith.addf %7, %9 : vector<16x64xf32>
    %c0_9 = arith.constant 0 : index
    %c0_10 = arith.constant 0 : index
    %11 = vector.load %arg5[%c0_9, %c0_10] : memref<1x64xf32, #tpu.memory_space<vmem>>, vector<1x64xf32>
    %12 = vector.broadcast %11 : vector<1x64xf32> to vector<16x64xf32>
    %13 = arith.addf %10, %12 : vector<16x64xf32>
    %cst_11 = arith.constant 0.000000e+00 : f32
    %14 = vector.broadcast %cst_11 : f32 to vector<16x64xf32>
    %15 = arith.cmpf oge, %13, %14 : vector<16x64xf32>
    %cst_12 = arith.constant 2.000000e-01 : f32
    %16 = vector.broadcast %cst_12 : f32 to vector<16x64xf32>
    %17 = arith.mulf %16, %13 : vector<16x64xf32>
    %18 = arith.select %15, %13, %17 : vector<16x64xi1>, vector<16x64xf32>
    %19 = tpu.iota {dimensions = array<i32: 1>} : vector<2x8x64xi32>
    %20 = vector.shape_cast %19 : vector<2x8x64xi32> to vector<16x64xi32>
    %c0_i32 = arith.constant 0 : i32
    %21 = vector.broadcast %c0_i32 : i32 to vector<16x64xi32>
    %22 = arith.cmpi eq, %20, %21 : vector<16x64xi32>
    %c1_i32 = arith.constant 1 : i32
    %23 = tpu.dynamic_rotate %18 by %c1_i32 dim 0 : vector<16x64xf32>, i32 -> vector<16x64xf32>
    %cst_13 = arith.constant 0.000000e+00 : f32
    %24 = vector.broadcast %cst_13 : f32 to vector<16x64xf32>
    %25 = arith.select %22, %24, %23 : vector<16x64xi1>, vector<16x64xf32>
    %c7_i32 = arith.constant 7 : i32
    %26 = vector.broadcast %c7_i32 : i32 to vector<16x64xi32>
    %27 = arith.cmpi eq, %20, %26 : vector<16x64xi32>
    %c15_i32 = arith.constant 15 : i32
    %28 = tpu.dynamic_rotate %18 by %c15_i32 dim 0 : vector<16x64xf32>, i32 -> vector<16x64xf32>
    %cst_14 = arith.constant 0.000000e+00 : f32
    %29 = vector.broadcast %cst_14 : f32 to vector<16x64xf32>
    %30 = arith.select %27, %29, %28 : vector<16x64xi1>, vector<16x64xf32>
    %31 = arith.truncf %18 : vector<16x64xf32> to vector<16x64xbf16>
    %32 = arith.truncf %25 : vector<16x64xf32> to vector<16x64xbf16>
    %33 = arith.truncf %30 : vector<16x64xf32> to vector<16x64xbf16>
    %c0_15 = arith.constant 0 : index
    %c0_16 = arith.constant 0 : index
    %c0_17 = arith.constant 0 : index
    %c0_18 = arith.constant 0 : index
    %34 = vector.load %arg6[%c0_15, %c0_16, %c0_17, %c0_18] : memref<2x2x64x128xbf16, #tpu.memory_space<vmem>>, vector<1x1x64x128xbf16>
    %35 = vector.shape_cast %34 : vector<1x1x64x128xbf16> to vector<64x128xbf16>
    %cst_19 = arith.constant dense<0.000000e+00> : vector<16x128xf32>
    %36 = tpu.matmul %32, %35, %cst_19 {dimension_numbers = #tpu.dot_dimension_numbers<[1], [0], [0], [1], [0, 0, 1, 1], [], []>} : vector<16x64xbf16>, vector<64x128xbf16>, vector<16x128xf32> -> vector<16x128xf32>
    %c0_20 = arith.constant 0 : index
    %c1_21 = arith.constant 1 : index
    %c0_22 = arith.constant 0 : index
    %c0_23 = arith.constant 0 : index
    %37 = vector.load %arg6[%c0_20, %c1_21, %c0_22, %c0_23] : memref<2x2x64x128xbf16, #tpu.memory_space<vmem>>, vector<1x1x64x128xbf16>
    %38 = vector.shape_cast %37 : vector<1x1x64x128xbf16> to vector<64x128xbf16>
    %cst_24 = arith.constant dense<0.000000e+00> : vector<16x128xf32>
    %39 = tpu.matmul %31, %38, %cst_24 {dimension_numbers = #tpu.dot_dimension_numbers<[1], [0], [0], [1], [0, 0, 1, 1], [], []>} : vector<16x64xbf16>, vector<64x128xbf16>, vector<16x128xf32> -> vector<16x128xf32>
    %40 = arith.addf %36, %39 : vector<16x128xf32>
    %c0_25 = arith.constant 0 : index
    %c0_26 = arith.constant 0 : index
    %41 = vector.load %arg7[%c0_25, %c0_26] : memref<1x128xf32, #tpu.memory_space<vmem>>, vector<1x128xf32>
    %42 = vector.broadcast %41 : vector<1x128xf32> to vector<16x128xf32>
    %43 = arith.addf %40, %42 : vector<16x128xf32>
    %cst_27 = arith.constant 0.000000e+00 : f32
    %44 = vector.broadcast %cst_27 : f32 to vector<16x128xf32>
    %45 = arith.maximumf %43, %44 : vector<16x128xf32>
    %c0_28 = arith.constant 0 : index
    %c0_29 = arith.constant 0 : index
    %c0_30 = arith.constant 0 : index
    %c0_31 = arith.constant 0 : index
    %46 = vector.load %arg2[%c0_28, %c0_29, %c0_30, %c0_31] : memref<2x2x8x128xf32, #tpu.memory_space<vmem>>, vector<2x1x8x128xf32>
    %47 = vector.shape_cast %46 : vector<2x1x8x128xf32> to vector<2x8x128xf32>
    %48 = vector.shape_cast %45 : vector<16x128xf32> to vector<2x8x128xf32>
    %49 = arith.addf %47, %48 : vector<2x8x128xf32>
    %c0_32 = arith.constant 0 : index
    %c0_33 = arith.constant 0 : index
    %c0_34 = arith.constant 0 : index
    %c0_35 = arith.constant 0 : index
    %50 = vector.load %arg8[%c0_32, %c0_33, %c0_34, %c0_35] : memref<2x2x8x128xf32, #tpu.memory_space<vmem>>, vector<2x1x8x128xf32>
    %51 = vector.shape_cast %50 : vector<2x1x8x128xf32> to vector<2x8x128xf32>
    %52 = vector.shape_cast %49 : vector<2x8x128xf32> to vector<2x1x8x128xf32>
    tpu.vector_store %arg8[%c0_32, %c0_33, %c0_34, %c0_35], %52 {strides = array<i32>} : memref<2x2x8x128xf32, #tpu.memory_space<vmem>>, vector<2x1x8x128xf32>,
    %c1_36 = arith.constant 1 : index
    %c0_37 = arith.constant 0 : index
    %c0_38 = arith.constant 0 : index
    %c0_39 = arith.constant 0 : index
    %53 = vector.load %arg6[%c1_36, %c0_37, %c0_38, %c0_39] : memref<2x2x64x128xbf16, #tpu.memory_space<vmem>>, vector<1x1x64x128xbf16>
    %54 = vector.shape_cast %53 : vector<1x1x64x128xbf16> to vector<64x128xbf16>
    %cst_40 = arith.constant dense<0.000000e+00> : vector<16x128xf32>
    %55 = tpu.matmul %31, %54, %cst_40 {dimension_numbers = #tpu.dot_dimension_numbers<[1], [0], [0], [1], [0, 0, 1, 1], [], []>} : vector<16x64xbf16>, vector<64x128xbf16>, vector<16x128xf32> -> vector<16x128xf32>
    %c1_41 = arith.constant 1 : index
    %c1_42 = arith.constant 1 : index
    %c0_43 = arith.constant 0 : index
    %c0_44 = arith.constant 0 : index
    %56 = vector.load %arg6[%c1_41, %c1_42, %c0_43, %c0_44] : memref<2x2x64x128xbf16, #tpu.memory_space<vmem>>, vector<1x1x64x128xbf16>
    %57 = vector.shape_cast %56 : vector<1x1x64x128xbf16> to vector<64x128xbf16>
    %cst_45 = arith.constant dense<0.000000e+00> : vector<16x128xf32>
    %58 = tpu.matmul %33, %57, %cst_45 {dimension_numbers = #tpu.dot_dimension_numbers<[1], [0], [0], [1], [0, 0, 1, 1], [], []>} : vector<16x64xbf16>, vector<64x128xbf16>, vector<16x128xf32> -> vector<16x128xf32>
    %59 = arith.addf %55, %58 : vector<16x128xf32>
    %c0_46 = arith.constant 0 : index
    %c0_47 = arith.constant 0 : index
    %60 = vector.load %arg7[%c0_46, %c0_47] : memref<1x128xf32, #tpu.memory_space<vmem>>, vector<1x128xf32>
    %61 = vector.broadcast %60 : vector<1x128xf32> to vector<16x128xf32>
    %62 = arith.addf %59, %61 : vector<16x128xf32>
    %cst_48 = arith.constant 0.000000e+00 : f32
    %63 = vector.broadcast %cst_48 : f32 to vector<16x128xf32>
    %64 = arith.maximumf %62, %63 : vector<16x128xf32>
    %c0_49 = arith.constant 0 : index
    %c1_50 = arith.constant 1 : index
    %c0_51 = arith.constant 0 : index
    %c0_52 = arith.constant 0 : index
    %65 = vector.load %arg2[%c0_49, %c1_50, %c0_51, %c0_52] : memref<2x2x8x128xf32, #tpu.memory_space<vmem>>, vector<2x1x8x128xf32>
    %66 = vector.shape_cast %65 : vector<2x1x8x128xf32> to vector<2x8x128xf32>
    %67 = vector.shape_cast %64 : vector<16x128xf32> to vector<2x8x128xf32>
    %68 = arith.addf %66, %67 : vector<2x8x128xf32>
    %c0_53 = arith.constant 0 : index
    %c1_54 = arith.constant 1 : index
    %c0_55 = arith.constant 0 : index
    %c0_56 = arith.constant 0 : index
    %69 = vector.load %arg8[%c0_53, %c1_54, %c0_55, %c0_56] : memref<2x2x8x128xf32, #tpu.memory_space<vmem>>, vector<2x1x8x128xf32>
    %70 = vector.shape_cast %69 : vector<2x1x8x128xf32> to vector<2x8x128xf32>
    %71 = vector.shape_cast %68 : vector<2x8x128xf32> to vector<2x1x8x128xf32>
    tpu.vector_store %arg8[%c0_53, %c1_54, %c0_55, %c0_56], %71 {strides = array<i32>} : memref<2x2x8x128xf32, #tpu.memory_space<vmem>>, vector<2x1x8x128xf32>,
    return
  }
  func.func @transform_0(%arg0: i32) -> (i32, i32, i32) {
    %c0_i32 = arith.constant 0 : i32
    %c0_i32_0 = arith.constant 0 : i32
    %c0_i32_1 = arith.constant 0 : i32
    return %arg0, %c0_i32, %c0_i32_0 : i32, i32, i32
  }
  func.func @transform_1(%arg0: i32) -> (i32, i32, i32, i32) {
    %c0_i32 = arith.constant 0 : i32
    %c0_i32_0 = arith.constant 0 : i32
    %c0_i32_1 = arith.constant 0 : i32
    %c0_i32_2 = arith.constant 0 : i32
    return %arg0, %c0_i32, %c0_i32_0, %c0_i32_1 : i32, i32, i32, i32
  }
  func.func @transform_2(%arg0: i32) -> (i32, i32) {
    %c0_i32 = arith.constant 0 : i32
    %c0_i32_0 = arith.constant 0 : i32
    %c0_i32_1 = arith.constant 0 : i32
    return %c0_i32, %c0_i32_0 : i32, i32
  }
  func.func @transform_3(%arg0: i32) -> (i32, i32) {
    %c0_i32 = arith.constant 0 : i32
    %c0_i32_0 = arith.constant 0 : i32
    %c0_i32_1 = arith.constant 0 : i32
    return %c0_i32, %c0_i32_0 : i32, i32
  }
  func.func @transform_4(%arg0: i32) -> (i32, i32) {
    %c0_i32 = arith.constant 0 : i32
    %c0_i32_0 = arith.constant 0 : i32
    %c0_i32_1 = arith.constant 0 : i32
    return %c0_i32, %c0_i32_0 : i32, i32
  }
  func.func @transform_5(%arg0: i32) -> (i32, i32, i32, i32) {
    %c0_i32 = arith.constant 0 : i32
    %c0_i32_0 = arith.constant 0 : i32
    %c0_i32_1 = arith.constant 0 : i32
    %c0_i32_2 = arith.constant 0 : i32
    %c0_i32_3 = arith.constant 0 : i32
    return %c0_i32, %c0_i32_0, %c0_i32_1, %c0_i32_2 : i32, i32, i32, i32
  }
  func.func @transform_6(%arg0: i32) -> (i32, i32) {
    %c0_i32 = arith.constant 0 : i32
    %c0_i32_0 = arith.constant 0 : i32
    %c0_i32_1 = arith.constant 0 : i32
    return %c0_i32, %c0_i32_0 : i32, i32
  }
  func.func @transform_7(%arg0: i32) -> (i32, i32, i32, i32) {
    %c0_i32 = arith.constant 0 : i32
    %c0_i32_0 = arith.constant 0 : i32
    %c0_i32_1 = arith.constant 0 : i32
    %c0_i32_2 = arith.constant 0 : i32
    return %arg0, %c0_i32, %c0_i32_0, %c0_i32_1 : i32, i32, i32, i32
  }
}

</mosaic_0001>

<llo_original>
// kernel: _lambda_.1
$region0: #{_lambda_.1}
  #allocation0 [shape = 'u32[]', space=smem, size = 0x4, offset = 0x4, fixed_abs, tag = 'smem constant byte address 0x4 - core index']
  #allocation1 [shape = 'u32[144,128]{1,0:T(1,128)}', space=vmem, size = 0x12000, scoped, tag = 'internal scratch']
  %s0 = inlined_call_operand.vmem [shape: f32[4,9,144], index: 0, kind: input, shape index: {}]
  %s1 = inlined_call_operand.vmem [shape: f32[4,2,8,128], index: 1, kind: input, shape index: {}]
  %s2 = inlined_call_operand.vmem [shape: bf16[144,64], index: 2, kind: input, shape index: {}]
  %s3 = inlined_call_operand.vmem [shape: bf16[144,64], index: 3, kind: input, shape index: {}]
  %s4 = inlined_call_operand.vmem [shape: f32[1,64], index: 4, kind: input, shape index: {}]
  %s5 = inlined_call_operand.vmem [shape: bf16[2,2,64,128], index: 5, kind: input, shape index: {}]
  %s6 = inlined_call_operand.vmem [shape: f32[1,128], index: 6, kind: input, shape index: {}]
  %s7 = inlined_call_operand.vmem [shape: f32[4,2,8,128], index: 7, kind: output, shape index: {}]
  %s8 = sld [smem:[#allocation0]]
  $region61: #{_lambda_.1} parent=0
    _
  %s10 = ssub.s32 1, %s8
  %s11 = scalar_select 0, %s10, %s8
  loop: start=0, step=1, limit=4
  $region2: #{_lambda_.1} parent=0 // loop_pre_header
    _
  $region3: #{_lambda_.1} parent=0 // loop_header
    %s13 = sphi 0, %s17
    %p14 = scmp.ge.s32.totalorder %s13, 4
    %s23 = sphi 0, %s25
    %s26 = sphi 0, %s23
    %s27 = sphi 0, %s26
    %s43 = sphi 0, %s27
    %s49 = sphi 0, %s51
    %s52 = sphi 0, %s49
    %s53 = sphi 0, %s52
    %s69 = sphi 0, %s53
    %s73 = sphi 0, %s73
    %s75 = sphi 0, %s73
    %s76 = sphi 0, %s75
    %s90 = sphi 0, %s76
    %s94 = sphi 0, %s94
    %s96 = sphi 0, %s94
    %s97 = sphi 0, %s96
    %s111 = sphi 0, %s97
    %s115 = sphi 0, %s115
    %s117 = sphi 0, %s115
    %s118 = sphi 0, %s117
    %s132 = sphi 0, %s118
    %s136 = sphi 0, %s136
    %s138 = sphi 0, %s136
    %s139 = sphi 0, %s138
    %s153 = sphi 0, %s139
    %s157 = sphi 0, %s157
    %s159 = sphi 0, %s157
    %s160 = sphi 0, %s159
    %s174 = sphi 0, %s160
    %s180 = sphi 0, %s182
    %s183 = sphi 0, %s180
    %s184 = sphi 0, %s183
    %s200 = sphi 0, %s184
  $region4: #{_lambda_.1} parent=0 // loop_header_branch
    %16 = sbr.rel (%p14) target = $region8
  $region5: #{_lambda_.1} parent=0 // loop_body
    %s18 = ssub.s32 %s13, 1
    %s19 = ssub.s32 %s13, 2
    %s20 = sadd.s32 %s13, 1
    %s21 = ssub.s32 %s13, %s20
    %p22 = scmp.eq.s32.totalorder %s21, 0
    %s24 = sadd.s32 %s23, 1
    %s25 = scalar_select %p22, %s23, %s24
    %p28 = pneg %p22
    %p29 = scmp.eq.s32.totalorder %s13, 1
    %p30 = por %p28, %p29
    %p31 = scmp.ne.s32.totalorder %s23, %s26
    %p32 = scmp.eq.s32.totalorder %s13, 0
    %p33 = por %p31, %p32
    %p34 = scmp.ne.s32.totalorder %s23, %s26
    %p35 = scmp.eq.s32.totalorder %s18, 1
    %p36 = por %p34, %p35
    %p37 = scmp.ne.s32.totalorder %s26, %s27
    %p38 = scmp.eq.s32.totalorder %s18, 0
    %p39 = por %p37, %p38
    %p40 = scmp.ne.s32.totalorder %s26, %s27
    %p41 = scmp.eq.s32.totalorder %s19, 1
    %p42 = por %p40, %p41
    %p44 = scmp.ne.s32.totalorder %s27, %s43
    %p45 = scmp.eq.s32.totalorder %s19, 0
    %p46 = por %p44, %p45
    %s47 = ssub.s32 %s13, %s20
    %p48 = scmp.eq.s32.totalorder %s47, 0
    %s50 = sadd.s32 %s49, 1
    %s51 = scalar_select %p48, %s49, %s50
    %p54 = pneg %p48
    %p55 = scmp.eq.s32.totalorder %s13, 1
    %p56 = por %p54, %p55
    %p57 = scmp.ne.s32.totalorder %s49, %s52
    %p58 = scmp.eq.s32.totalorder %s13, 0
    %p59 = por %p57, %p58
    %p60 = scmp.ne.s32.totalorder %s49, %s52
    %p61 = scmp.eq.s32.totalorder %s18, 1
    %p62 = por %p60, %p61
    %p63 = scmp.ne.s32.totalorder %s52, %s53
    %p64 = scmp.eq.s32.totalorder %s18, 0
    %p65 = por %p63, %p64
    %p66 = scmp.ne.s32.totalorder %s52, %s53
    %p67 = scmp.eq.s32.totalorder %s19, 1
    %p68 = por %p66, %p67
    %p70 = scmp.ne.s32.totalorder %s53, %s69
    %p71 = scmp.eq.s32.totalorder %s19, 0
    %p72 = por %p70, %p71
    %s74 = sadd.s32 %s73, 1
    %p77 = scmp.eq.s32.totalorder %s13, 1
    %p78 = scmp.ne.s32.totalorder %s73, %s75
    %p79 = scmp.eq.s32.totalorder %s13, 0
    %p80 = por %p78, %p79
    %p81 = scmp.ne.s32.totalorder %s73, %s75
    %p82 = scmp.eq.s32.totalorder %s18, 1
    %p83 = por %p81, %p82
    %p84 = scmp.ne.s32.totalorder %s75, %s76
    %p85 = scmp.eq.s32.totalorder %s18, 0
    %p86 = por %p84, %p85
    %p87 = scmp.ne.s32.totalorder %s75, %s76
    %p88 = scmp.eq.s32.totalorder %s19, 1
    %p89 = por %p87, %p88
    %p91 = scmp.ne.s32.totalorder %s76, %s90
    %p92 = scmp.eq.s32.totalorder %s19, 0
    %p93 = por %p91, %p92
    %s95 = sadd.s32 %s94, 1
    %p98 = scmp.eq.s32.totalorder %s13, 1
    %p99 = scmp.ne.s32.totalorder %s94, %s96
    %p100 = scmp.eq.s32.totalorder %s13, 0
    %p101 = por %p99, %p100
    %p102 = scmp.ne.s32.totalorder %s94, %s96
    %p103 = scmp.eq.s32.totalorder %s18, 1
    %p104 = por %p102, %p103
    %p105 = scmp.ne.s32.totalorder %s96, %s97
    %p106 = scmp.eq.s32.totalorder %s18, 0
    %p107 = por %p105, %p106
    %p108 = scmp.ne.s32.totalorder %s96, %s97
    %p109 = scmp.eq.s32.totalorder %s19, 1
    %p110 = por %p108, %p109
    %p112 = scmp.ne.s32.totalorder %s97, %s111
    %p113 = scmp.eq.s32.totalorder %s19, 0
    %p114 = por %p112, %p113
    %s116 = sadd.s32 %s115, 1
    %p119 = scmp.eq.s32.totalorder %s13, 1
    %p120 = scmp.ne.s32.totalorder %s115, %s117
    %p121 = scmp.eq.s32.totalorder %s13, 0
    %p122 = por %p120, %p121
    %p123 = scmp.ne.s32.totalorder %s115, %s117
    %p124 = scmp.eq.s32.totalorder %s18, 1
    %p125 = por %p123, %p124
    %p126 = scmp.ne.s32.totalorder %s117, %s118
    %p127 = scmp.eq.s32.totalorder %s18, 0
    %p128 = por %p126, %p127
    %p129 = scmp.ne.s32.totalorder %s117, %s118
    %p130 = scmp.eq.s32.totalorder %s19, 1
    %p131 = por %p129, %p130
    %p133 = scmp.ne.s32.totalorder %s118, %s132
    %p134 = scmp.eq.s32.totalorder %s19, 0
    %p135 = por %p133, %p134
    %s137 = sadd.s32 %s136, 1
    %p140 = scmp.eq.s32.totalorder %s13, 1
    %p141 = scmp.ne.s32.totalorder %s136, %s138
    %p142 = scmp.eq.s32.totalorder %s13, 0
    %p143 = por %p141, %p142
    %p144 = scmp.ne.s32.totalorder %s136, %s138
    %p145 = scmp.eq.s32.totalorder %s18, 1
    %p146 = por %p144, %p145
    %p147 = scmp.ne.s32.totalorder %s138, %s139
    %p148 = scmp.eq.s32.totalorder %s18, 0
    %p149 = por %p147, %p148
    %p150 = scmp.ne.s32.totalorder %s138, %s139
    %p151 = scmp.eq.s32.totalorder %s19, 1
    %p152 = por %p150, %p151
    %p154 = scmp.ne.s32.totalorder %s139, %s153
    %p155 = scmp.eq.s32.totalorder %s19, 0
    %p156 = por %p154, %p155
    %s158 = sadd.s32 %s157, 1
    %p161 = scmp.eq.s32.totalorder %s13, 1
    %p162 = scmp.ne.s32.totalorder %s157, %s159
    %p163 = scmp.eq.s32.totalorder %s13, 0
    %p164 = por %p162, %p163
    %p165 = scmp.ne.s32.totalorder %s157, %s159
    %p166 = scmp.eq.s32.totalorder %s18, 1
    %p167 = por %p165, %p166
    %p168 = scmp.ne.s32.totalorder %s159, %s160
    %p169 = scmp.eq.s32.totalorder %s18, 0
    %p170 = por %p168, %p169
    %p171 = scmp.ne.s32.totalorder %s159, %s160
    %p172 = scmp.eq.s32.totalorder %s19, 1
    %p173 = por %p171, %p172
    %p175 = scmp.ne.s32.totalorder %s160, %s174
    %p176 = scmp.eq.s32.totalorder %s19, 0
    %p177 = por %p175, %p176
    %s178 = ssub.s32 %s13, %s20
    %p179 = scmp.eq.s32.totalorder %s178, 0
    %s181 = sadd.s32 %s180, 1
    %s182 = scalar_select %p179, %s180, %s181
    %p185 = pneg %p179
    %p186 = scmp.eq.s32.totalorder %s13, 1
    %p187 = por %p185, %p186
    %p188 = scmp.ne.s32.totalorder %s180, %s183
    %p189 = scmp.eq.s32.totalorder %s13, 0
    %p190 = por %p188, %p189
    %p191 = scmp.ne.s32.totalorder %s180, %s183
    %p192 = scmp.eq.s32.totalorder %s18, 1
    %p193 = por %p191, %p192
    %p194 = scmp.ne.s32.totalorder %s183, %s184
    %p195 = scmp.eq.s32.totalorder %s18, 0
    %p196 = por %p194, %p195
    %p197 = scmp.ne.s32.totalorder %s183, %s184
    %p198 = scmp.eq.s32.totalorder %s19, 1
    %p199 = por %p197, %p198
    %p201 = scmp.ne.s32.totalorder %s184, %s200
    %p202 = scmp.eq.s32.totalorder %s19, 0
    %p203 = por %p201, %p202
    %p204 = scmp.le.s32.totalorder 1, %s13
    %p205 = scmp.lt.s32.totalorder %s13, 3
    %p206 = pnand %p204, %p205
    %p207 = pneg %p206
    // Predicated region
    $region9: #{_lambda_.1} parent=5 // pred_check
      _
    $region10: #{_lambda_.1} parent=5 // pred_check_branch
      %209 = sbr.rel (%p206) target = $region12
    $region11: #{_lambda_.1} parent=5 // pred_region
      %s210 = ssub.s32 %s13, 1
      // Predicated region
      $region13: #{_lambda_.1} parent=11 // pred_check
        %p211 = pneg %p86
      $region14: #{_lambda_.1} parent=11 // pred_check_branch
        %213 = sbr.rel (%p211) target = $region16
      $region15: #{_lambda_.1} parent=11 // pred_region
        _
      $region16: #{_lambda_.1} parent=11 // pred_fallthru
        _
      // Predicated region
      $region17: #{_lambda_.1} parent=11 // pred_check
        %p214 = pneg %p107
      $region18: #{_lambda_.1} parent=11 // pred_check_branch
        %216 = sbr.rel (%p214) target = $region20
      $region19: #{_lambda_.1} parent=11 // pred_region
        _
      $region20: #{_lambda_.1} parent=11 // pred_fallthru
        _
      // Predicated region
      $region21: #{_lambda_.1} parent=11 // pred_check
        %p217 = pneg %p128
      $region22: #{_lambda_.1} parent=11 // pred_check_branch
        %219 = sbr.rel (%p217) target = $region24
      $region23: #{_lambda_.1} parent=11 // pred_region
        _
      $region24: #{_lambda_.1} parent=11 // pred_fallthru
        _
      // Predicated region
      $region25: #{_lambda_.1} parent=11 // pred_check
        %p220 = pneg %p149
      $region26: #{_lambda_.1} parent=11 // pred_check_branch
        %222 = sbr.rel (%p220) target = $region28
      $region27: #{_lambda_.1} parent=11 // pred_region
        _
      $region28: #{_lambda_.1} parent=11 // pred_fallthru
        _
      // Predicated region
      $region29: #{_lambda_.1} parent=11 // pred_check
        %p223 = pneg %p170
      $region30: #{_lambda_.1} parent=11 // pred_check_branch
        %225 = sbr.rel (%p223) target = $region32
      $region31: #{_lambda_.1} parent=11 // pred_region
        _
      $region32: #{_lambda_.1} parent=11 // pred_fallthru
        _
    $region12: #{_lambda_.1} parent=5 // pred_fallthru
      _
    %p226 = scmp.lt.s32.totalorder %s13, 2
    // Predicated region
    $region33: #{_lambda_.1} parent=5 // pred_check
      %p227 = pneg %p226
    $region34: #{_lambda_.1} parent=5 // pred_check_branch
      %229 = sbr.rel (%p227) target = $region36
    $region35: #{_lambda_.1} parent=5 // pred_region
      // Predicated region
      $region37: #{_lambda_.1} parent=35 // pred_check
        %p230 = pneg %p33
      $region38: #{_lambda_.1} parent=35 // pred_check_branch
        %232 = sbr.rel (%p230) target = $region40
      $region39: #{_lambda_.1} parent=35 // pred_region
        %s233 = smul.u32 2, %s13
        %p234 = scmp.lt.s32.totalorder %s233, 3
        %s235 = scalar_select %p234, %s233, 3
        %s236 = smul.addr %s235, 4
        %s237 = smul.addr %s236, 8
        %s238 = scalar_lea.vmem %s0, %s237
        %s239 = smul.u32 2, %s13
      $region40: #{_lambda_.1} parent=35 // pred_fallthru
        _
      // Predicated region
      $region41: #{_lambda_.1} parent=35 // pred_check
        %p240 = pneg %p59
      $region42: #{_lambda_.1} parent=35 // pred_check_branch
        %242 = sbr.rel (%p240) target = $region44
      $region43: #{_lambda_.1} parent=35 // pred_region
        %s243 = smul.u32 2, %s13
        %p244 = scmp.lt.s32.totalorder %s243, 3
        %s245 = scalar_select %p244, %s243, 3
        %s246 = smul.addr %s245, 2
        %s247 = smul.addr %s246, 8
        %s248 = scalar_lea.vmem %s1, %s247
        %s249 = smul.u32 2, %s13
      $region44: #{_lambda_.1} parent=35 // pred_fallthru
        _
    $region36: #{_lambda_.1} parent=5 // pred_fallthru
      _
    %p250 = scmp.le.s32.totalorder 1, %s13
    %p251 = scmp.lt.s32.totalorder %s13, 3
    %p252 = pnand %p250, %p251
    %p253 = pneg %p252
    // Predicated region
    $region45: #{_lambda_.1} parent=5 // pred_check
      _
    $region46: #{_lambda_.1} parent=5 // pred_check_branch
      %255 = sbr.rel (%p252) target = $region48
    $region47: #{_lambda_.1} parent=5 // pred_region
      %s256 = ssub.s32 %s13, 1
      %s257 = smul.u32 2, %s18
      %p258 = scmp.lt.s32.totalorder %s257, 3
      %s259 = scalar_select %p258, %s257, 3
      %s260 = smul.addr %s259, 4
      %s261 = smul.addr %s260, 8
      %s262 = scalar_lea.vmem %s0, %s261
      %p263 = pneg %p39
      %p264 = pneg %p36
      %s265 = smul.u32 2, %s18
      %p266 = scmp.lt.s32.totalorder %s265, 3
      %s267 = scalar_select %p266, %s265, 3
      %s268 = smul.addr %s267, 2
      %s269 = smul.addr %s268, 8
      %s270 = scalar_lea.vmem %s1, %s269
      %p271 = pneg %p65
      %p272 = pneg %p62
      %p273 = pneg %p86
      %p274 = pneg %p83
      %p275 = pneg %p107
      %p276 = pneg %p104
      %p277 = pneg %p128
      %p278 = pneg %p125
      %p279 = pneg %p149
      %p280 = pneg %p146
      %p281 = pneg %p170
      %p282 = pneg %p167
      %p283 = pneg %p196
      %p284 = pneg %p193
      %s285 = smul.u32 2, %s18
      %p286 = scmp.lt.s32.totalorder %s285, 3
      %s287 = scalar_select %p286, %s285, 3
      %s288 = smul.addr %s287, 2
      %s289 = smul.addr %s288, 8
      %s290 = scalar_lea.vmem %s7, %s289
      %s291 = smul.u32 2, %s18
      %p292 = scmp.lt.s32.totalorder %s291, 3
      %s293 = scalar_select %p292, %s291, 3
      %s294 = smul.addr %s293, 4
      %s295 = smul.addr %s294, 8
      %s296 = scalar_lea.vmem %s0, %s295
      %s297 = smul.u32 2, %s18
      %s298 = smul.u32 2, %s18
      %p299 = scmp.lt.s32.totalorder %s298, 3
      %s300 = scalar_select %p299, %s298, 3
      %s301 = smul.addr %s300, 2
      %s302 = smul.addr %s301, 8
      %s303 = scalar_lea.vmem %s1, %s302
      %s304 = smul.u32 2, %s18
      %s305 = smul.u32 2, %s18
      %p306 = scmp.lt.s32.totalorder %s305, 3
      %s307 = scalar_select %p306, %s305, 3
      %s308 = smul.addr %s307, 2
      %s309 = smul.addr %s308, 8
      %s310 = scalar_lea.vmem %s7, %s309
      %s311 = smul.u32 2, %s18
      %v313 = vld [vmem:[%s296] sm:$0xff]
      %v314 = vld [vmem:[%s296 + $0x8] sm:$0xff]
      %v315 = vld [vmem:[%s296 + $0x20] sm:$0xff]
      %v316 = vld [vmem:[%s296 + $0x28] sm:$0xff]
      %v317 = vpack.c.bf16 %v315, %v313
      %v318 = vpack.c.bf16 %v316, %v314
      %v319 = vld [vmem:[%s296] sm:$0xfe]
      %v320 = vld [vmem:[%s296 + $0x8] sm:$0xfe]
      %v321 = vld [vmem:[%s296 + $0x10] sm:$0x1]
      %v322 = vld [vmem:[%s296 + $0x18] sm:$0x1]
      %v323 = vld [vmem:[%s296 + $0x20] sm:$0xfe]
      %v324 = vld [vmem:[%s296 + $0x28] sm:$0xfe]
      %v325 = vld [vmem:[%s296 + $0x30] sm:$0x1]
      %v326 = vld [vmem:[%s296 + $0x38] sm:$0x1]
      %vm335 = vcmask 1046528
      %v336 = vrot.slane %v319, 1
      %v337 = vrot.slane %v321, 1
      %v338 = vsel %vm335, %v336, %v337
      %v339 = vrot.slane %v320, 1
      %v340 = vrot.slane %v322, 1
      %v341 = vsel %vm335, %v339, %v340
      %v342 = vrot.slane %v323, 1
      %v343 = vrot.slane %v325, 1
      %v344 = vsel %vm335, %v342, %v343
      %v345 = vrot.slane %v324, 1
      %v346 = vrot.slane %v326, 1
      %v347 = vsel %vm335, %v345, %v346
      %v352 = vpack.c.bf16 %v344, %v338
      %v353 = vpack.c.bf16 %v347, %v341
      %v354 = vld [vmem:[%s2] sm:$0xf]
      %v355 = vld [vmem:[%s2 + $0x4] sm:$0xf]
      %v356 = vld [vmem:[%s2 + $0x8] sm:$0xf]
      %v357 = vld [vmem:[%s2 + $0xc] sm:$0xf]
      %v358 = vld [vmem:[%s2 + $0x10] sm:$0xf]
      %v359 = vld [vmem:[%s2 + $0x14] sm:$0xf]
      %v360 = vld [vmem:[%s2 + $0x18] sm:$0xf]
      %v361 = vld [vmem:[%s2 + $0x1c] sm:$0xf]
      %v362 = vld [vmem:[%s2 + $0x20] sm:$0xf]
      %v363 = vld [vmem:[%s2 + $0x24] sm:$0xf]
      %v364 = vld [vmem:[%s2 + $0x28] sm:$0xf]
      %v365 = vld [vmem:[%s2 + $0x2c] sm:$0xf]
      %v366 = vld [vmem:[%s2 + $0x30] sm:$0xf]
      %v367 = vld [vmem:[%s2 + $0x34] sm:$0xf]
      %v368 = vld [vmem:[%s2 + $0x38] sm:$0xf]
      %v369 = vld [vmem:[%s2 + $0x3c] sm:$0xf]
      %v370 = vld [vmem:[%s2 + $0x40] sm:$0xf]
      %v371 = vld [vmem:[%s2 + $0x44] sm:$0xf]
      %v372 = vld [vmem:[%s3] sm:$0xf]
      %v373 = vld [vmem:[%s3 + $0x4] sm:$0xf]
      %v374 = vld [vmem:[%s3 + $0x8] sm:$0xf]
      %v375 = vld [vmem:[%s3 + $0xc] sm:$0xf]
      %v376 = vld [vmem:[%s3 + $0x10] sm:$0xf]
      %v377 = vld [vmem:[%s3 + $0x14] sm:$0xf]
      %v378 = vld [vmem:[%s3 + $0x18] sm:$0xf]
      %v379 = vld [vmem:[%s3 + $0x1c] sm:$0xf]
      %v380 = vld [vmem:[%s3 + $0x20] sm:$0xf]
      %v381 = vld [vmem:[%s3 + $0x24] sm:$0xf]
      %v382 = vld [vmem:[%s3 + $0x28] sm:$0xf]
      %v383 = vld [vmem:[%s3 + $0x2c] sm:$0xf]
      %v384 = vld [vmem:[%s3 + $0x30] sm:$0xf]
      %v385 = vld [vmem:[%s3 + $0x34] sm:$0xf]
      %v386 = vld [vmem:[%s3 + $0x38] sm:$0xf]
      %v387 = vld [vmem:[%s3 + $0x3c] sm:$0xf]
      %v388 = vld [vmem:[%s3 + $0x40] sm:$0xf]
      %v389 = vld [vmem:[%s3 + $0x44] sm:$0xf]
      %v408 = vunpack.c.l.b16 %v372
      %v409 = vunpack.c.l.b16 %v373
      %v410 = vunpack.c.l.b16 %v374
      %v411 = vunpack.c.l.b16 %v375
      %v412 = vunpack.c.l.b16 %v376
      %v413 = vunpack.c.l.b16 %v377
      %v414 = vunpack.c.l.b16 %v378
      %v415 = vunpack.c.l.b16 %v379
      %v416 = vunpack.c.l.b16 %v380
      %v417 = vunpack.c.l.b16 %v381
      %v418 = vunpack.c.l.b16 %v382
      %v419 = vunpack.c.l.b16 %v383
      %v420 = vunpack.c.l.b16 %v384
      %v421 = vunpack.c.l.b16 %v385
      %v422 = vunpack.c.l.b16 %v386
      %v423 = vunpack.c.l.b16 %v387
      %v424 = vunpack.c.l.b16 %v388
      %v425 = vunpack.c.l.b16 %v389
      %v426 = vpack.c.b16 %v409, %v408
      %v427 = vpack.c.b16 %v411, %v410
      %v428 = vpack.c.b16 %v413, %v412
      %v429 = vpack.c.b16 %v415, %v414
      %v430 = vpack.c.b16 %v417, %v416
      %v431 = vpack.c.b16 %v419, %v418
      %v432 = vpack.c.b16 %v421, %v420
      %v433 = vpack.c.b16 %v423, %v422
      %v434 = vpack.c.b16 %v425, %v424
      %vm444 = vcmask 130048
      %v446 = vsel %vm444, %v353, 0
      %448 = vmatprep.subr.bf16.mxu0 0
      %449 = vmatpush1.bf16.msra.mxu0 %v433
      %450 = vmatprep.subr.bf16.mxu0 0
      %451 = vmatpush1.bf16.msra.mxu0 %v432
      %452 = vmatprep.subr.bf16.mxu0 0
      %453 = vmatpush1.bf16.msra.mxu0 %v431
      %454 = vmatprep.subr.bf16.mxu0 0
      %455 = vmatpush1.bf16.msra.mxu0 %v430
      %456 = vmatprep.subr.bf16.mxu0 0
      %457 = vmatpush1.bf16.msra.mxu0 %v429
      %458 = vmatprep.subr.bf16.mxu0 0
      %459 = vmatpush1.bf16.msra.mxu0 %v428
      %460 = vmatprep.subr.bf16.mxu0 0
      %461 = vmatpush1.bf16.msra.mxu0 %v427
      %462 = vmatprep.subr.bf16.mxu0 0
      %463 = vmatpush1.bf16.msra.mxu0 %v426
      %464 = vmatprep.subr.bf16.mxu0 0
      %465 = vmatpush2.bf16.msra.mxu0 0
      %466 = vmatprep.subr.bf16.mxu0 0
      %467 = vmatpush2.bf16.msra.mxu0 0
      %468 = vmatprep.subr.bf16.mxu0 0
      %469 = vmatpush2.bf16.msra.mxu0 0
      %470 = vmatprep.subr.bf16.mxu0 0
      %471 = vmatpush2.bf16.msra.mxu0 0
      %472 = vmatprep.subr.bf16.mxu0 0
      %473 = vmatpush2.bf16.msra.mxu0 0
      %474 = vmatprep.subr.bf16.mxu0 0
      %475 = vmatpush2.bf16.msra.mxu0 0
      %476 = vmatprep.subr.bf16.mxu0 0
      %477 = vmatpush2.bf16.msra.mxu0 0
      %478 = vmatprep.subr.bf16.mxu0 0
      %479 = vmatpush2.bf16.msra.mxu0 %v434
      %480 = vmatprep.mubr.bf16.mxu0 %v446
      %481 = vmatmul.mubr.bf16.gmra.mxu0 %v352
      %v482 = vpop.f32.mrf.mxu0
      %v483 = vadd.f32 0.0, %v482
      %v484 = vpop.f32.mrf.mxu0
      %v485 = vpop.f32.mrf.mxu0
      %v486 = vadd.f32 0.0, %v485
      %v487 = vpop.f32.mrf.mxu0
      %488 = vdwg.mxu0
      %v507 = vunpack.c.l.b16 %v354
      %v508 = vunpack.c.l.b16 %v355
      %v509 = vunpack.c.l.b16 %v356
      %v510 = vunpack.c.l.b16 %v357
      %v511 = vunpack.c.l.b16 %v358
      %v512 = vunpack.c.l.b16 %v359
      %v513 = vunpack.c.l.b16 %v360
      %v514 = vunpack.c.l.b16 %v361
      %v515 = vunpack.c.l.b16 %v362
      %v516 = vunpack.c.l.b16 %v363
      %v517 = vunpack.c.l.b16 %v364
      %v518 = vunpack.c.l.b16 %v365
      %v519 = vunpack.c.l.b16 %v366
      %v520 = vunpack.c.l.b16 %v367
      %v521 = vunpack.c.l.b16 %v368
      %v522 = vunpack.c.l.b16 %v369
      %v523 = vunpack.c.l.b16 %v370
      %v524 = vunpack.c.l.b16 %v371
      %v525 = vpack.c.b16 %v508, %v507
      %v526 = vpack.c.b16 %v510, %v509
      %v527 = vpack.c.b16 %v512, %v511
      %v528 = vpack.c.b16 %v514, %v513
      %v529 = vpack.c.b16 %v516, %v515
      %v530 = vpack.c.b16 %v518, %v517
      %v531 = vpack.c.b16 %v520, %v519
      %v532 = vpack.c.b16 %v522, %v521
      %v533 = vpack.c.b16 %v524, %v523
      %v544 = vsel %vm444, %v318, 0
      %546 = vmatprep.subr.bf16.mxu0 0
      %547 = vmatpush1.bf16.msra.mxu0 %v532
      %548 = vmatprep.subr.bf16.mxu0 0
      %549 = vmatpush1.bf16.msra.mxu0 %v531
      %550 = vmatprep.subr.bf16.mxu0 0
      %551 = vmatpush1.bf16.msra.mxu0 %v530
      %552 = vmatprep.subr.bf16.mxu0 0
      %553 = vmatpush1.bf16.msra.mxu0 %v529
      %554 = vmatprep.subr.bf16.mxu0 0
      %555 = vmatpush1.bf16.msra.mxu0 %v528
      %556 = vmatprep.subr.bf16.mxu0 0
      %557 = vmatpush1.bf16.msra.mxu0 %v527
      %558 = vmatprep.subr.bf16.mxu0 0
      %559 = vmatpush1.bf16.msra.mxu0 %v526
      %560 = vmatprep.subr.bf16.mxu0 0
      %561 = vmatpush1.bf16.msra.mxu0 %v525
      %562 = vmatprep.subr.bf16.mxu0 0
      %563 = vmatpush2.bf16.msra.mxu0 0
      %564 = vmatprep.subr.bf16.mxu0 0
      %565 = vmatpush2.bf16.msra.mxu0 0
      %566 = vmatprep.subr.bf16.mxu0 0
      %567 = vmatpush2.bf16.msra.mxu0 0
      %568 = vmatprep.subr.bf16.mxu0 0
      %569 = vmatpush2.bf16.msra.mxu0 0
      %570 = vmatprep.subr.bf16.mxu0 0
      %571 = vmatpush2.bf16.msra.mxu0 0
      %572 = vmatprep.subr.bf16.mxu0 0
      %573 = vmatpush2.bf16.msra.mxu0 0
      %574 = vmatprep.subr.bf16.mxu0 0
      %575 = vmatpush2.bf16.msra.mxu0 0
      %576 = vmatprep.subr.bf16.mxu0 0
      %577 = vmatpush2.bf16.msra.mxu0 %v533
      %578 = vmatprep.mubr.bf16.mxu0 %v544
      %579 = vmatmul.mubr.bf16.gmra.mxu0 %v317
      %v580 = vpop.f32.mrf.mxu0
      %v581 = vadd.f32 %v483, %v580
      %v582 = vpop.f32.mrf.mxu0
      %v583 = vpop.f32.mrf.mxu0
      %v584 = vadd.f32 %v486, %v583
      %v585 = vpop.f32.mrf.mxu0
      %586 = vdwg.mxu0
      %v587 = vld [vmem:[%s4] sm:$0x1]
      %v589 = vlaneseq
      %v590 = vshrl.u32 %v589, 7
      %v591 = vsub.s32 0, %v590
      %v592 = vrot.slane %v587, %v591
      %v594 = vadd.f32 %v581, %v592
      %v595 = vadd.f32 %v584, %v592
      %vm596 = vcmp.ge.f32.partialorder %v594, 0.0
      %vm597 = vcmp.ge.f32.partialorder %v595, 0.0
      %v598 = vmul.f32 %v594, 0.2
      %v599 = vmul.f32 %v595, 0.2
      %v600 = vsel %vm596, %v594, %v598
      %v601 = vsel %vm597, %v595, %v599
      %v602 = vlaneseq
      %v603 = vshrl.u32 %v602, 7
      %vm604 = vcmp.eq.s32.totalorder %v603, 0
      %v605 = vrot.slane %v600, 7
      %v606 = vrot.slane %v601, 7
      %vm607 = vcmp.lt.s32.totalorder %v603, 1
      %v608 = vsel %vm607, %v605, %v606
      %v609 = vsel %vm607, %v606, %v605
      %v610 = vsel %vm604, 0.0, %v609
      %v611 = vsel %vm604, 0.0, %v608
      %vm612 = vcmp.eq.s32.totalorder %v603, 7
      %v613 = vrot.slane %v600, 1
      %v614 = vrot.slane %v601, 1
      %vm615 = vcmp.lt.s32.totalorder %v603, 7
      %v616 = vsel %vm615, %v613, %v614
      %v617 = vsel %vm615, %v614, %v613
      %v618 = vsel %vm612, 0.0, %v616
      %v619 = vsel %vm612, 0.0, %v617
      %v620 = vpack.c.bf16 %v601, %v600
      %v621 = vpack.c.bf16 %v611, %v610
      %v622 = vpack.c.bf16 %v619, %v618
      %v623 = vld [vmem:[%s5] sm:$0xf]
      %v624 = vld [vmem:[%s5 + $0x4] sm:$0xf]
      %v625 = vld [vmem:[%s5 + $0x8] sm:$0xf]
      %v626 = vld [vmem:[%s5 + $0xc] sm:$0xf]
      %v627 = vld [vmem:[%s5 + $0x10] sm:$0xf]
      %v628 = vld [vmem:[%s5 + $0x14] sm:$0xf]
      %v629 = vld [vmem:[%s5 + $0x18] sm:$0xf]
      %v630 = vld [vmem:[%s5 + $0x1c] sm:$0xf]
      %s631 = scalar_lea.vmem %s5, 32
      %v632 = vld [vmem:[%s631] sm:$0xf]
      %v633 = vld [vmem:[%s631 + $0x4] sm:$0xf]
      %v634 = vld [vmem:[%s631 + $0x8] sm:$0xf]
      %v635 = vld [vmem:[%s631 + $0xc] sm:$0xf]
      %v636 = vld [vmem:[%s631 + $0x10] sm:$0xf]
      %v637 = vld [vmem:[%s631 + $0x14] sm:$0xf]
      %v638 = vld [vmem:[%s631 + $0x18] sm:$0xf]
      %v639 = vld [vmem:[%s631 + $0x1c] sm:$0xf]
      %v648 = vunpack.c.l.b16 %v632
      %v649 = vunpack.c.l.b16 %v633
      %v650 = vunpack.c.l.b16 %v634
      %v651 = vunpack.c.l.b16 %v635
      %v652 = vunpack.c.l.b16 %v636
      %v653 = vunpack.c.l.b16 %v637
      %v654 = vunpack.c.l.b16 %v638
      %v655 = vunpack.c.l.b16 %v639
      %v656 = vpack.c.b16 %v649, %v648
      %v657 = vpack.c.b16 %v651, %v650
      %v658 = vpack.c.b16 %v653, %v652
      %v659 = vpack.c.b16 %v655, %v654
      %vm664 = vcmask 523264
      %v666 = vsel %vm664, %v620, 0
      %668 = vmatprep.subr.bf16.mxu0 0
      %669 = vmatpush1.bf16.msra.mxu0 0
      %670 = vmatprep.subr.bf16.mxu0 0
      %671 = vmatpush1.bf16.msra.mxu0 0
      %672 = vmatprep.subr.bf16.mxu0 0
      %673 = vmatpush1.bf16.msra.mxu0 0
      %674 = vmatprep.subr.bf16.mxu0 0
      %675 = vmatpush1.bf16.msra.mxu0 0
      %676 = vmatprep.subr.bf16.mxu0 0
      %677 = vmatpush1.bf16.msra.mxu0 %v659
      %678 = vmatprep.subr.bf16.mxu0 0
      %679 = vmatpush1.bf16.msra.mxu0 %v658
      %680 = vmatprep.subr.bf16.mxu0 0
      %681 = vmatpush1.bf16.msra.mxu0 %v657
      %682 = vmatprep.subr.bf16.mxu0 0
      %683 = vmatpush1.bf16.msra.mxu0 %v656
      %684 = vmatprep.subr.bf16.mxu0 0
      %685 = vmatpush2.bf16.msra.mxu0 0
      %686 = vmatprep.subr.bf16.mxu0 0
      %687 = vmatpush2.bf16.msra.mxu0 0
      %688 = vmatprep.subr.bf16.mxu0 0
      %689 = vmatpush2.bf16.msra.mxu0 0
      %690 = vmatprep.subr.bf16.mxu0 0
      %691 = vmatpush2.bf16.msra.mxu0 0
      %692 = vmatprep.subr.bf16.mxu0 0
      %693 = vmatpush2.bf16.msra.mxu0 0
      %694 = vmatprep.subr.bf16.mxu0 0
      %695 = vmatpush2.bf16.msra.mxu0 0
      %696 = vmatprep.subr.bf16.mxu0 0
      %697 = vmatpush2.bf16.msra.mxu0 0
      %698 = vmatprep.subr.bf16.mxu0 0
      %699 = vmatpush2.bf16.msra.mxu0 0
      %700 = vmatprep.mubr.bf16.mxu0 0
      %701 = vmatmul.mubr.bf16.gmra.mxu0 %v666
      %v702 = vpop.f32.mrf.mxu0
      %v703 = vadd.f32 0.0, %v702
      %v704 = vpop.f32.mrf.mxu0
      %v705 = vpop.f32.mrf.mxu0
      %v706 = vadd.f32 0.0, %v705
      %v707 = vpop.f32.mrf.mxu0
      %708 = vdwg.mxu0
      %v717 = vunpack.c.l.b16 %v623
      %v718 = vunpack.c.l.b16 %v624
      %v719 = vunpack.c.l.b16 %v625
      %v720 = vunpack.c.l.b16 %v626
      %v721 = vunpack.c.l.b16 %v627
      %v722 = vunpack.c.l.b16 %v628
      %v723 = vunpack.c.l.b16 %v629
      %v724 = vunpack.c.l.b16 %v630
      %v725 = vpack.c.b16 %v718, %v717
      %v726 = vpack.c.b16 %v720, %v719
      %v727 = vpack.c.b16 %v722, %v721
      %v728 = vpack.c.b16 %v724, %v723
      %v734 = vsel %vm664, %v621, 0
      %736 = vmatprep.subr.bf16.mxu0 0
      %737 = vmatpush1.bf16.msra.mxu0 0
      %738 = vmatprep.subr.bf16.mxu0 0
      %739 = vmatpush1.bf16.msra.mxu0 0
      %740 = vmatprep.subr.bf16.mxu0 0
      %741 = vmatpush1.bf16.msra.mxu0 0
      %742 = vmatprep.subr.bf16.mxu0 0
      %743 = vmatpush1.bf16.msra.mxu0 0
      %744 = vmatprep.subr.bf16.mxu0 0
      %745 = vmatpush1.bf16.msra.mxu0 %v728
      %746 = vmatprep.subr.bf16.mxu0 0
      %747 = vmatpush1.bf16.msra.mxu0 %v727
      %748 = vmatprep.subr.bf16.mxu0 0
      %749 = vmatpush1.bf16.msra.mxu0 %v726
      %750 = vmatprep.subr.bf16.mxu0 0
      %751 = vmatpush1.bf16.msra.mxu0 %v725
      %752 = vmatprep.subr.bf16.mxu0 0
      %753 = vmatpush2.bf16.msra.mxu0 0
      %754 = vmatprep.subr.bf16.mxu0 0
      %755 = vmatpush2.bf16.msra.mxu0 0
      %756 = vmatprep.subr.bf16.mxu0 0
      %757 = vmatpush2.bf16.msra.mxu0 0
      %758 = vmatprep.subr.bf16.mxu0 0
      %759 = vmatpush2.bf16.msra.mxu0 0
      %760 = vmatprep.subr.bf16.mxu0 0
      %761 = vmatpush2.bf16.msra.mxu0 0
      %762 = vmatprep.subr.bf16.mxu0 0
      %763 = vmatpush2.bf16.msra.mxu0 0
      %764 = vmatprep.subr.bf16.mxu0 0
      %765 = vmatpush2.bf16.msra.mxu0 0
      %766 = vmatprep.subr.bf16.mxu0 0
      %767 = vmatpush2.bf16.msra.mxu0 0
      %768 = vmatprep.mubr.bf16.mxu0 0
      %769 = vmatmul.mubr.bf16.gmra.mxu0 %v734
      %v770 = vpop.f32.mrf.mxu0
      %v771 = vadd.f32 %v703, %v770
      %v772 = vpop.f32.mrf.mxu0
      %v773 = vpop.f32.mrf.mxu0
      %v774 = vadd.f32 %v706, %v773
      %v775 = vpop.f32.mrf.mxu0
      %776 = vdwg.mxu0
      %v777 = vld [vmem:[%s6] sm:$0x1]
      %v779 = vlaneseq
      %v780 = vshrl.u32 %v779, 7
      %v781 = vsub.s32 0, %v780
      %v782 = vrot.slane %v777, %v781
      %v784 = vadd.f32 %v771, %v782
      %v785 = vadd.f32 %v774, %v782
      %v786 = vmax.f32 %v784, 0.0
      %v787 = vmax.f32 %v785, 0.0
      %v788 = vld [vmem:[%s303] sm:$0xff]
      %v789 = vld [vmem:[%s303 + $0x10] sm:$0xff]
      %v790 = vadd.f32 %v788, %v786
      %v791 = vadd.f32 %v789, %v787
      %792 = vst [vmem:[%s310] sm:$0xff] %v790
      %793 = vst [vmem:[%s310 + $0x10] sm:$0xff] %v791
      %s794 = scalar_lea.vmem %s5, 64
      %v795 = vld [vmem:[%s794] sm:$0xf]
      %v796 = vld [vmem:[%s794 + $0x4] sm:$0xf]
      %v797 = vld [vmem:[%s794 + $0x8] sm:$0xf]
      %v798 = vld [vmem:[%s794 + $0xc] sm:$0xf]
      %v799 = vld [vmem:[%s794 + $0x10] sm:$0xf]
      %v800 = vld [vmem:[%s794 + $0x14] sm:$0xf]
      %v801 = vld [vmem:[%s794 + $0x18] sm:$0xf]
      %v802 = vld [vmem:[%s794 + $0x1c] sm:$0xf]
      %s803 = scalar_lea.vmem %s5, 96
      %v804 = vld [vmem:[%s803] sm:$0xf]
      %v805 = vld [vmem:[%s803 + $0x4] sm:$0xf]
      %v806 = vld [vmem:[%s803 + $0x8] sm:$0xf]
      %v807 = vld [vmem:[%s803 + $0xc] sm:$0xf]
      %v808 = vld [vmem:[%s803 + $0x10] sm:$0xf]
      %v809 = vld [vmem:[%s803 + $0x14] sm:$0xf]
      %v810 = vld [vmem:[%s803 + $0x18] sm:$0xf]
      %v811 = vld [vmem:[%s803 + $0x1c] sm:$0xf]
      %v820 = vunpack.c.l.b16 %v804
      %v821 = vunpack.c.l.b16 %v805
      %v822 = vunpack.c.l.b16 %v806
      %v823 = vunpack.c.l.b16 %v807
      %v824 = vunpack.c.l.b16 %v808
      %v825 = vunpack.c.l.b16 %v809
      %v826 = vunpack.c.l.b16 %v810
      %v827 = vunpack.c.l.b16 %v811
      %v828 = vpack.c.b16 %v821, %v820
      %v829 = vpack.c.b16 %v823, %v822
      %v830 = vpack.c.b16 %v825, %v824
      %v831 = vpack.c.b16 %v827, %v826
      %v837 = vsel %vm664, %v622, 0
      %839 = vmatprep.subr.bf16.mxu0 0
      %840 = vmatpush1.bf16.msra.mxu0 0
      %841 = vmatprep.subr.bf16.mxu0 0
      %842 = vmatpush1.bf16.msra.mxu0 0
      %843 = vmatprep.subr.bf16.mxu0 0
      %844 = vmatpush1.bf16.msra.mxu0 0
      %845 = vmatprep.subr.bf16.mxu0 0
      %846 = vmatpush1.bf16.msra.mxu0 0
      %847 = vmatprep.subr.bf16.mxu0 0
      %848 = vmatpush1.bf16.msra.mxu0 %v831
      %849 = vmatprep.subr.bf16.mxu0 0
      %850 = vmatpush1.bf16.msra.mxu0 %v830
      %851 = vmatprep.subr.bf16.mxu0 0
      %852 = vmatpush1.bf16.msra.mxu0 %v829
      %853 = vmatprep.subr.bf16.mxu0 0
      %854 = vmatpush1.bf16.msra.mxu0 %v828
      %855 = vmatprep.subr.bf16.mxu0 0
      %856 = vmatpush2.bf16.msra.mxu0 0
      %857 = vmatprep.subr.bf16.mxu0 0
      %858 = vmatpush2.bf16.msra.mxu0 0
      %859 = vmatprep.subr.bf16.mxu0 0
      %860 = vmatpush2.bf16.msra.mxu0 0
      %861 = vmatprep.subr.bf16.mxu0 0
      %862 = vmatpush2.bf16.msra.mxu0 0
      %863 = vmatprep.subr.bf16.mxu0 0
      %864 = vmatpush2.bf16.msra.mxu0 0
      %865 = vmatprep.subr.bf16.mxu0 0
      %866 = vmatpush2.bf16.msra.mxu0 0
      %867 = vmatprep.subr.bf16.mxu0 0
      %868 = vmatpush2.bf16.msra.mxu0 0
      %869 = vmatprep.subr.bf16.mxu0 0
      %870 = vmatpush2.bf16.msra.mxu0 0
      %871 = vmatprep.mubr.bf16.mxu0 0
      %872 = vmatmul.mubr.bf16.gmra.mxu0 %v837
      %v873 = vpop.f32.mrf.mxu0
      %v874 = vadd.f32 0.0, %v873
      %v875 = vpop.f32.mrf.mxu0
      %v876 = vpop.f32.mrf.mxu0
      %v877 = vadd.f32 0.0, %v876
      %v878 = vpop.f32.mrf.mxu0
      %879 = vdwg.mxu0
      %v888 = vunpack.c.l.b16 %v795
      %v889 = vunpack.c.l.b16 %v796
      %v890 = vunpack.c.l.b16 %v797
      %v891 = vunpack.c.l.b16 %v798
      %v892 = vunpack.c.l.b16 %v799
      %v893 = vunpack.c.l.b16 %v800
      %v894 = vunpack.c.l.b16 %v801
      %v895 = vunpack.c.l.b16 %v802
      %v896 = vpack.c.b16 %v889, %v888
      %v897 = vpack.c.b16 %v891, %v890
      %v898 = vpack.c.b16 %v893, %v892
      %v899 = vpack.c.b16 %v895, %v894
      %904 = vmatprep.subr.bf16.mxu0 0
      %905 = vmatpush1.bf16.msra.mxu0 0
      %906 = vmatprep.subr.bf16.mxu0 0
      %907 = vmatpush1.bf16.msra.mxu0 0
      %908 = vmatprep.subr.bf16.mxu0 0
      %909 = vmatpush1.bf16.msra.mxu0 0
      %910 = vmatprep.subr.bf16.mxu0 0
      %911 = vmatpush1.bf16.msra.mxu0 0
      %912 = vmatprep.subr.bf16.mxu0 0
      %913 = vmatpush1.bf16.msra.mxu0 %v899
      %914 = vmatprep.subr.bf16.mxu0 0
      %915 = vmatpush1.bf16.msra.mxu0 %v898
      %916 = vmatprep.subr.bf16.mxu0 0
      %917 = vmatpush1.bf16.msra.mxu0 %v897
      %918 = vmatprep.subr.bf16.mxu0 0
      %919 = vmatpush1.bf16.msra.mxu0 %v896
      %920 = vmatprep.subr.bf16.mxu0 0
      %921 = vmatpush2.bf16.msra.mxu0 0
      %922 = vmatprep.subr.bf16.mxu0 0
      %923 = vmatpush2.bf16.msra.mxu0 0
      %924 = vmatprep.subr.bf16.mxu0 0
      %925 = vmatpush2.bf16.msra.mxu0 0
      %926 = vmatprep.subr.bf16.mxu0 0
      %927 = vmatpush2.bf16.msra.mxu0 0
      %928 = vmatprep.subr.bf16.mxu0 0
      %929 = vmatpush2.bf16.msra.mxu0 0
      %930 = vmatprep.subr.bf16.mxu0 0
      %931 = vmatpush2.bf16.msra.mxu0 0
      %932 = vmatprep.subr.bf16.mxu0 0
      %933 = vmatpush2.bf16.msra.mxu0 0
      %934 = vmatprep.subr.bf16.mxu0 0
      %935 = vmatpush2.bf16.msra.mxu0 0
      %936 = vmatprep.mubr.bf16.mxu0 0
      %937 = vmatmul.mubr.bf16.gmra.mxu0 %v666
      %v938 = vpop.f32.mrf.mxu0
      %v939 = vadd.f32 %v874, %v938
      %v940 = vpop.f32.mrf.mxu0
      %v941 = vpop.f32.mrf.mxu0
      %v942 = vadd.f32 %v877, %v941
      %v943 = vpop.f32.mrf.mxu0
      %944 = vdwg.mxu0
      %v945 = vld [vmem:[%s6] sm:$0x1]
      %v947 = vlaneseq
      %v948 = vshrl.u32 %v947, 7
      %v949 = vsub.s32 0, %v948
      %v950 = vrot.slane %v945, %v949
      %v952 = vadd.f32 %v939, %v950
      %v953 = vadd.f32 %v942, %v950
      %v954 = vmax.f32 %v952, 0.0
      %v955 = vmax.f32 %v953, 0.0
      %s956 = scalar_lea.vmem %s303, 8
      %v957 = vld [vmem:[%s956] sm:$0xff]
      %v958 = vld [vmem:[%s956 + $0x10] sm:$0xff]
      %v959 = vadd.f32 %v957, %v954
      %v960 = vadd.f32 %v958, %v955
      %s961 = scalar_lea.vmem %s310, 8
      %962 = vst [vmem:[%s961] sm:$0xff] %v959
      %963 = vst [vmem:[%s961 + $0x10] sm:$0xff] %v960
      %s964 = smul.u32 2, %s18
      %p965 = scmp.lt.s32.totalorder %s964, 3
      %s966 = scalar_select %p965, %s964, 3
      %s967 = smul.addr %s966, 2
      %s968 = smul.addr %s967, 8
      %s969 = scalar_lea.vmem %s7, %s968
      // Predicated region
      $region49: #{_lambda_.1} parent=47 // pred_check
        %p970 = pneg %p193
      $region50: #{_lambda_.1} parent=47 // pred_check_branch
        %972 = sbr.rel (%p970) target = $region52
      $region51: #{_lambda_.1} parent=47 // pred_region
        %s973 = smul.u32 2, %s18
      $region52: #{_lambda_.1} parent=47 // pred_fallthru
        _
    $region48: #{_lambda_.1} parent=5 // pred_fallthru
      _
    %p974 = scmp.le.s32.totalorder 2, %s13
    // Predicated region
    $region53: #{_lambda_.1} parent=5 // pred_check
      %p975 = pneg %p974
    $region54: #{_lambda_.1} parent=5 // pred_check_branch
      %977 = sbr.rel (%p975) target = $region56
    $region55: #{_lambda_.1} parent=5 // pred_region
      %s978 = ssub.s32 %s13, 2
      // Predicated region
      $region57: #{_lambda_.1} parent=55 // pred_check
        %p979 = pneg %p199
      $region58: #{_lambda_.1} parent=55 // pred_check_branch
        %981 = sbr.rel (%p979) target = $region60
      $region59: #{_lambda_.1} parent=55 // pred_region
        %s982 = smul.u32 2, %s19
        %p983 = scmp.lt.s32.totalorder %s982, 3
        %s984 = scalar_select %p983, %s982, 3
        %s985 = smul.addr %s984, 2
        %s986 = smul.addr %s985, 8
        %s987 = scalar_lea.vmem %s7, %s986
      $region60: #{_lambda_.1} parent=55 // pred_fallthru
        _
    $region56: #{_lambda_.1} parent=5 // pred_fallthru
      _
  $region6: #{_lambda_.1} parent=0 // loop_footer
    %s17 = sadd.s32 1, %s13
  $region7: #{_lambda_.1} parent=0 // loop_footer_branch
    %12 = sbr.rel target = $region3
  $region8: #{_lambda_.1} parent=0 // loop_exit
    _

</llo_original>
